<compile_context>
chip_gen: v7x
topology: tpu7x:2x2x1
jax: 0.10.0
libtpu: 0.0.40
codegen_flags: <defaults>
</compile_context>

<pallas_src>
import jax
import jax.numpy as jnp
from jax.experimental import pallas as pl
from jax.experimental.pallas import tpu as pltpu


def _auto_one_weighted_loss_kernel(p_ref, x1_ref, x2_ref, loss_ref, lam_ref):
    # p_ref, x1_ref, x2_ref : SMEM f32[1]   (scalars on the scalar path)
    # loss_ref, lam_ref     : VMEM f32[1,1] (full-block outputs, one store each)
    p_vec = jnp.full((1, 1), p_ref[0], dtype=jnp.float32)   # scalar -> vreg broadcast
    lam = jax.nn.sigmoid(p_vec)                             # EUP exp, vector path
    loss_ref[...] = lam * x1_ref[0] + (1.0 - lam) * x2_ref[0]
    lam_ref[...] = lam


def _forward_pallas(params, x1, x2):
    # Keep everything f32 (matches the PyTorch module; avoid silent up/down casts).
    p = jnp.asarray(params, jnp.float32).reshape(1)
    a = jnp.asarray(x1, jnp.float32).reshape(1)
    b = jnp.asarray(x2, jnp.float32).reshape(1)

    smem_spec = pl.BlockSpec(memory_space=pltpu.MemorySpace.SMEM)
    vmem_spec = pl.BlockSpec(memory_space=pltpu.MemorySpace.VMEM)

    loss_out, lam_out = pl.pallas_call(
        _auto_one_weighted_loss_kernel,
        out_shape=(
            jax.ShapeDtypeStruct((1, 1), jnp.float32),  # loss_sum
            jax.ShapeDtypeStruct((1, 1), jnp.float32),  # lambda
        ),
        in_specs=[smem_spec, smem_spec, smem_spec],
        out_specs=(vmem_spec, vmem_spec),
    )(p, a, b)

    return loss_out[0, 0], lam_out[0, 0]


@jax.custom_vjp
def _auto_one_weighted(params, x1, x2):
    return _forward_pallas(params, x1, x2)


def _auto_one_weighted_fwd(params, x1, x2):
    loss_sum, lam = _forward_pallas(params, x1, x2)
    return (loss_sum, lam), (lam, jnp.asarray(x1, jnp.float32), jnp.asarray(x2, jnp.float32))


def _auto_one_weighted_bwd(residuals, cotangents):
    lam, x1, x2 = residuals
    g_loss, _g_lam = cotangents  # lambda is "detached" (.item()) in the reference module
    d_params = g_loss * (x1 - x2) * lam * (1.0 - lam)
    d_x1 = g_loss * lam
    d_x2 = g_loss * (1.0 - lam)
    return d_params, d_x1, d_x2


_auto_one_weighted.defvjp(_auto_one_weighted_fwd, _auto_one_weighted_bwd)


@jax.jit
def auto_one_weighted_loss(params, x1, x2):
    """Pallas implementation of AutoOneWeightedLoss.forward.

    Returns (loss_sum, [lambda_]).
    """
    loss_sum, lam = _auto_one_weighted(params, x1, x2)
    # TODO(synk): PyTorch's `.item()` returns a host Python float; we return a
    # stop-gradient device scalar to keep the training step async/jittable.
    return loss_sum, [jax.lax.stop_gradient(lam)]


if __name__ == "__main__":
    key = jax.random.PRNGKey(0)
    k1, k2 = jax.random.split(key)

    # Deterministic parameter init exactly as in the module: params = 0.0
    params = jnp.float32(0.0)

    # Two synthetic scalar losses.
    x1 = jax.random.uniform(k1, (), dtype=jnp.float32) * 3.0
    x2 = jax.random.uniform(k2, (), dtype=jnp.float32) * 3.0

    loss_sum, lam_list = auto_one_weighted_loss(params, x1, x2)
    loss_sum = jax.block_until_ready(loss_sum)
    lam = jax.block_until_ready(lam_list[0])

    # Forward reference check in plain JAX.
    lam_ref = jax.nn.sigmoid(params)
    ref = lam_ref * x1 + (1.0 - lam_ref) * x2
    assert jnp.allclose(loss_sum, ref, rtol=1e-6, atol=1e-6)
    assert jnp.allclose(lam, lam_ref, rtol=1e-6, atol=1e-6)

    # Backward (custom_vjp) check — the module's params must receive gradients.
    g_p, g_x1, g_x2 = jax.grad(
        lambda p, a, b: auto_one_weighted_loss(p, a, b)[0], argnums=(0, 1, 2)
    )(params, x1, x2)
    g_p = jax.block_until_ready(g_p)
    assert jnp.allclose(g_x1, lam_ref, rtol=1e-6, atol=1e-6)
    assert jnp.allclose(g_x2, 1.0 - lam_ref, rtol=1e-6, atol=1e-6)
    assert jnp.allclose(g_p, (x1 - x2) * lam_ref * (1.0 - lam_ref), rtol=1e-6, atol=1e-6)

    print("KERNEL_OK")
</pallas_src>

<mosaic_0001>
module attributes {stable_mosaic.version = 11 : i64} {
  func.func @_auto_one_weighted_loss_kernel(%arg0: memref<1xf32, #tpu.memory_space<smem>>, %arg1: memref<1xf32, #tpu.memory_space<smem>>, %arg2: memref<1xf32, #tpu.memory_space<smem>>, %arg3: memref<1x1xf32, #tpu.memory_space<vmem>>, %arg4: memref<1x1xf32, #tpu.memory_space<vmem>>) attributes {dimension_semantics = [], scalar_prefetch = 0 : i64, scratch_operands = 0 : i64, tpu.core_type = #tpu.core_type<tc>} {
    %c0 = arith.constant 0 : index
    %0 = memref.load %arg0[%c0] : memref<1xf32, #tpu.memory_space<smem>>
    %1 = vector.broadcast %0 : f32 to vector<1x1xf32>
    %2 = arith.negf %1 : vector<1x1xf32>
    %3 = math.exp %2 : vector<1x1xf32>
    %cst = arith.constant 1.000000e+00 : f32
    %4 = vector.broadcast %cst : f32 to vector<1x1xf32>
    %5 = arith.addf %4, %3 : vector<1x1xf32>
    %6 = arith.divf %4, %5 : vector<1x1xf32>
    %c0_0 = arith.constant 0 : index
    %7 = memref.load %arg1[%c0_0] : memref<1xf32, #tpu.memory_space<smem>>
    %8 = vector.broadcast %7 : f32 to vector<1x1xf32>
    %9 = arith.mulf %6, %8 : vector<1x1xf32>
    %cst_1 = arith.constant 1.000000e+00 : f32
    %10 = vector.broadcast %cst_1 : f32 to vector<1x1xf32>
    %11 = arith.subf %10, %6 : vector<1x1xf32>
    %c0_2 = arith.constant 0 : index
    %12 = memref.load %arg2[%c0_2] : memref<1xf32, #tpu.memory_space<smem>>
    %13 = vector.broadcast %12 : f32 to vector<1x1xf32>
    %14 = arith.mulf %11, %13 : vector<1x1xf32>
    %15 = arith.addf %9, %14 : vector<1x1xf32>
    %c0_3 = arith.constant 0 : index
    %c0_4 = arith.constant 0 : index
    %16 = vector.load %arg3[%c0_3, %c0_4] : memref<1x1xf32, #tpu.memory_space<vmem>>, vector<1x1xf32>
    tpu.vector_store %arg3[%c0_3, %c0_4], %15 {strides = array<i32>} : memref<1x1xf32, #tpu.memory_space<vmem>>, vector<1x1xf32>,
    %c0_5 = arith.constant 0 : index
    %c0_6 = arith.constant 0 : index
    %17 = vector.load %arg4[%c0_5, %c0_6] : memref<1x1xf32, #tpu.memory_space<vmem>>, vector<1x1xf32>
    tpu.vector_store %arg4[%c0_5, %c0_6], %6 {strides = array<i32>} : memref<1x1xf32, #tpu.memory_space<vmem>>, vector<1x1xf32>,
    return
  }
}

</mosaic_0001>

<llo_original>
// kernel: auto_one_weighted_loss.1
$region0: #{auto_one_weighted_loss.1}
  #allocation0 [shape = 'u32[]', space=smem, size = 0x4, offset = 0x4, fixed_abs, tag = 'smem constant byte address 0x4 - core index']
  #allocation1 [shape = 'u32[144,128]{1,0:T(1,128)}', space=vmem, size = 0x12000, scoped, tag = 'internal scratch']
  #allocation2 [shape = 'f32[1]{0:T(128)S(6)}', space=smem, size = 0x200, scoped, tag = 'scoped memory for auto_one_weighted_loss.1']
  #allocation3 [shape = 'f32[1]{0:T(128)S(6)}', space=smem, size = 0x200, scoped, tag = 'scoped memory for auto_one_weighted_loss.1']
  #allocation4 [shape = 'f32[1]{0:T(128)S(6)}', space=smem, size = 0x200, scoped, tag = 'scoped memory for auto_one_weighted_loss.1']
  %s0 = inlined_call_operand.<no memory space> [shape: f32[1], index: 0, kind: input, shape index: {}]
  %s1 = inlined_call_operand.<no memory space> [shape: f32[1], index: 1, kind: input, shape index: {}]
  %s2 = inlined_call_operand.<no memory space> [shape: f32[1], index: 2, kind: input, shape index: {}]
  %s3 = inlined_call_operand.hbm [shape: f32[1,1], index: 3, kind: output, shape index: {0}]
  %s4 = inlined_call_operand.hbm [shape: f32[1,1], index: 4, kind: output, shape index: {1}]
  %5 = xla_tuple %s3, %s4
  %s6 = sld [smem:[#allocation0]]
  $region30: #{auto_one_weighted_loss.1} parent=0
    _
  %s8 = ssub.s32 1, %s6
  %s9 = scalar_select 0, %s8, %s6
  %10 = sst [smem:[#allocation2]] %s0
  %11 = sst [smem:[#allocation3]] %s1
  %12 = sst [smem:[#allocation4]] %s2
  $region1: #{auto_one_weighted_loss.1} parent=0
    #allocation5 [shape = 'u8[512]{0}', space=vmem, size = 0x400, scoped, tag = 'output window, operand 0, single buffered']
    #allocation6 [shape = 's32[1]{0}', space=sflag, size = 0x4, scoped, tag = 'scoped memory for auto_one_weighted_loss.1']
    #allocation7 [shape = 'u8[512]{0}', space=vmem, size = 0x400, scoped, tag = 'output window, operand 1, single buffered']
    #allocation8 [shape = 's32[1]{0}', space=sflag, size = 0x4, scoped, tag = 'scoped memory for auto_one_weighted_loss.1']
    %13 = vsyncpa [#allocation6], 0
    %14 = vsyncpa [#allocation8], 0
    // Predicated region
    $region2: #{auto_one_weighted_loss.1} parent=1 // pred_check
      _
    $region3: #{auto_one_weighted_loss.1} parent=1 // pred_check_branch
      %16 = sbr.rel (0) target = $region5
    $region4: #{auto_one_weighted_loss.1} parent=1 // pred_region
      _
    $region5: #{auto_one_weighted_loss.1} parent=1 // pred_fallthru
      _
    // Predicated region
    $region6: #{auto_one_weighted_loss.1} parent=1 // pred_check
      _
    $region7: #{auto_one_weighted_loss.1} parent=1 // pred_check_branch
      %18 = sbr.rel (0) target = $region9
    $region8: #{auto_one_weighted_loss.1} parent=1 // pred_region
      _
    $region9: #{auto_one_weighted_loss.1} parent=1 // pred_fallthru
      _
    // Predicated region
    $region10: #{auto_one_weighted_loss.1} parent=1 // pred_check
      _
    $region11: #{auto_one_weighted_loss.1} parent=1 // pred_check_branch
      %20 = sbr.rel (0) target = $region13
    $region12: #{auto_one_weighted_loss.1} parent=1 // pred_region
      _
    $region13: #{auto_one_weighted_loss.1} parent=1 // pred_fallthru
      _
    %s21 = sld [smem:[#allocation2]]
    %v22 = vstv %s21
    %v23 = vxor.u32 %v22, 2147483648
    %v24 = vmul.f32 %v23, 1.442695
    %v25 = vpow.pop %v24
    %v26 = vadd.f32 %v25, 1.0
    %v27 = vrcp.pop %v26
    %v28 = vmul.f32 1.0, %v27
    %s29 = sld [smem:[#allocation3]]
    %v30 = vstv %s29
    %v31 = vmul.f32 %v28, %v30
    %v32 = vsub.f32 1.0, %v28
    %s33 = sld [smem:[#allocation4]]
    %v34 = vstv %s33
    %v35 = vmul.f32 %v32, %v34
    %v36 = vadd.f32 %v31, %v35
    %vm37 = vcmask 0
    %38 = vst.msk [vmem:[#allocation5] sm:$0x1] %vm37, %v36
    %39 = vst.msk [vmem:[#allocation7] sm:$0x1] %vm37, %v28
    // Predicated region
    $region14: #{auto_one_weighted_loss.1} parent=1 // pred_check
      _
    $region15: #{auto_one_weighted_loss.1} parent=1 // pred_check_branch
      %41 = sbr.rel (0) target = $region17
    $region16: #{auto_one_weighted_loss.1} parent=1 // pred_region
      %s43 = ssub.s32 16, 16
      %44 = vsyncadd [#allocation6], %s43
      %s46 = sshll.u32 [#allocation5], 4
      %s47 = int_to_ptr.vmem [resolvable:$true] %s46
      %49 = dma.vmem_to_hbm [thread:$0]  %s47, 16, %s3, [#allocation6]
    $region17: #{auto_one_weighted_loss.1} parent=1 // pred_fallthru
      _
    // Predicated region
    $region18: #{auto_one_weighted_loss.1} parent=1 // pred_check
      _
    $region19: #{auto_one_weighted_loss.1} parent=1 // pred_check_branch
      %51 = sbr.rel (0) target = $region21
    $region20: #{auto_one_weighted_loss.1} parent=1 // pred_region
      %s53 = ssub.s32 16, 16
      %54 = vsyncadd [#allocation8], %s53
      %s56 = sshll.u32 [#allocation7], 4
      %s57 = int_to_ptr.vmem [resolvable:$true] %s56
      %59 = dma.vmem_to_hbm [thread:$0]  %s57, 16, %s4, [#allocation8]
    $region21: #{auto_one_weighted_loss.1} parent=1 // pred_fallthru
      _
    // Predicated region
    $region22: #{auto_one_weighted_loss.1} parent=1 // pred_check
      _
    $region23: #{auto_one_weighted_loss.1} parent=1 // pred_check_branch
      %61 = sbr.rel (0) target = $region25
    $region24: #{auto_one_weighted_loss.1} parent=1 // pred_region
      %62 = dma.done [#allocation6], 16
    $region25: #{auto_one_weighted_loss.1} parent=1 // pred_fallthru
      _
    // Predicated region
    $region26: #{auto_one_weighted_loss.1} parent=1 // pred_check
      _
    $region27: #{auto_one_weighted_loss.1} parent=1 // pred_check_branch
      %64 = sbr.rel (0) target = $region29
    $region28: #{auto_one_weighted_loss.1} parent=1 // pred_region
      %65 = dma.done [#allocation8], 16
    $region29: #{auto_one_weighted_loss.1} parent=1 // pred_fallthru
      _
    %66 = vsyncpa [#allocation6], 1
    %67 = vsyncpa [#allocation8], 1

</llo_original>
